<compile_context>
chip_gen: v7x
topology: tpu7x:2x2x1
jax: 0.10.0
libtpu: 0.0.40
codegen_flags: <defaults>
</compile_context>

<pallas_src>
import functools

import jax
import jax.numpy as jnp
from jax.experimental import pallas as pl
from jax.experimental.pallas import tpu as pltpu

_LANES = 128
_SUBLANES = 8
_TARGET_TILE_ROWS = 1024  # ~512 KiB per f32 input block per buffer
_MAX_OUTER = 2            # parallel outer grid axis (v7x megacore); harmless on 1-TC chips


def _round_up(x, m):
    return ((x + m - 1) // m) * m


def _mse_kernel(p_ref, l_ref, o_ref, *, rows_total, tile_rows, inner_steps, need_mask):
    i = pl.program_id(0)  # outer ("parallel") axis
    j = pl.program_id(1)  # inner ("arbitrary") reduction axis

    # The output block index depends only on i, so it stays resident in VMEM
    # across the inner reduction axis and acts as the accumulator.
    @pl.when(j == 0)
    def _():
        o_ref[...] = jnp.zeros_like(o_ref)

    d = p_ref[...].astype(jnp.float32) - l_ref[...].astype(jnp.float32)
    sq = d * d

    if need_mask:
        # Zero out rows past the end of the (unpadded) row range. The logical
        # tile index is used here; the index_map clamps the DMA source
        # separately so no DMA ever starts fully out of bounds.
        row0 = (i * inner_steps + j) * tile_rows
        row_ids = row0 + jax.lax.broadcasted_iota(jnp.int32, sq.shape, 0)
        sq = jnp.where(row_ids < rows_total, sq, 0.0)

    # Fold the (tile_rows, 128) tile into the (1, 8, 128) accumulator with pure
    # VPU adds -- no per-step cross-lane (XLU) reduction in the hot loop.
    o_ref[...] += jnp.sum(sq.reshape(1, -1, _SUBLANES, _LANES), axis=1)


def mse_loss(predictions, labels):
    """Equivalent of torch.nn.MSELoss()(predictions, labels) (mean reduction)."""
    assert predictions.shape == labels.shape, "shapes must match"
    out_dtype = jnp.result_type(predictions.dtype, labels.dtype)
    n = predictions.size

    p = predictions.reshape(-1)
    l = labels.reshape(-1)

    # Pad only up to one lane row (<= 127 elements); zeros add nothing to the
    # SSE. No wrapper-side astype: the f32 cast happens inside the kernel.
    pad = (-n) % _LANES
    if pad:
        p = jnp.pad(p, (0, pad))
        l = jnp.pad(l, (0, pad))
    rows = (n + pad) // _LANES

    p2 = p.reshape(rows, _LANES)
    l2 = l.reshape(rows, _LANES)

    # Sublane multiple for the block shape depends on element width
    # (8 for 4-byte, 16 for 2-byte, 32 for 1-byte dtypes).
    itemsize = jnp.dtype(p2.dtype).itemsize
    sub_mult = max(_SUBLANES, 32 // max(itemsize, 1))
    tile_rows = min(_TARGET_TILE_ROWS, _round_up(rows, sub_mult))

    total_tiles = -(-rows // tile_rows)
    num_outer = min(_MAX_OUTER, total_tiles)
    inner_steps = -(-total_tiles // num_outer)
    # Masking is only needed when the tile grid over-covers the row range.
    need_mask = (num_outer * inner_steps * tile_rows) != rows

    def in_map(i, j):
        # Clamp the source tile so overhanging grid steps re-read a valid tile
        # (their contribution is zeroed by the in-kernel row mask).
        t = jnp.minimum(i * inner_steps + j, total_tiles - 1)
        return (t, 0)

    kernel = functools.partial(
        _mse_kernel,
        rows_total=rows,
        tile_rows=tile_rows,
        inner_steps=inner_steps,
        need_mask=need_mask,
    )

    partials = pl.pallas_call(
        kernel,
        out_shape=jax.ShapeDtypeStruct((num_outer, _SUBLANES, _LANES), jnp.float32),
        grid_spec=pltpu.PrefetchScalarGridSpec(
            num_scalar_prefetch=0,
            grid=(num_outer, inner_steps),
            in_specs=[
                pl.BlockSpec((tile_rows, _LANES), in_map),
                pl.BlockSpec((tile_rows, _LANES), in_map),
            ],
            out_specs=pl.BlockSpec((1, _SUBLANES, _LANES), lambda i, j: (i, 0, 0)),
        ),
        compiler_params=pltpu.CompilerParams(
            dimension_semantics=("parallel", "arbitrary"),
        ),
    )(p2, l2)

    # Tiny final reduce over (num_outer, 8, 128) partial sums + mean divide.
    return (jnp.sum(partials) / jnp.float32(n)).astype(out_dtype)


if __name__ == "__main__":
    key = jax.random.PRNGKey(0)
    k1, k2 = jax.random.split(key)

    # Small NCHW-style shapes, consistent with a generic regression target.
    predictions = jax.random.normal(k1, (2, 4, 16, 16), dtype=jnp.float32)
    labels = jax.random.normal(k2, (2, 4, 16, 16), dtype=jnp.float32)

    loss = mse_loss(predictions, labels)
    loss = jax.block_until_ready(loss)

    # Cross-check against plain JAX reference.
    ref = jnp.mean((predictions - labels) ** 2)
    assert jnp.allclose(loss, ref, rtol=1e-5, atol=1e-6), (loss, ref)

    print("KERNEL_OK")
</pallas_src>

<mosaic_0001>
module attributes {stable_mosaic.version = 11 : i64} {
  func.func @_mse_kernel(%arg0: i32, %arg1: i32, %arg2: memref<16x128xf32, #tpu.memory_space<vmem>>, %arg3: memref<16x128xf32, #tpu.memory_space<vmem>>, %arg4: memref<1x8x128xf32, #tpu.memory_space<vmem>>) attributes {dimension_semantics = [#tpu.dimension_semantics<parallel>, #tpu.dimension_semantics<arbitrary>], iteration_bounds = array<i64: 1, 1>, scalar_prefetch = 0 : i64, scratch_operands = 0 : i64, tpu.core_type = #tpu.core_type<tc>, window_params = [{transform_indices = @transform_0, window_bounds = array<i64: 16, 128>}, {transform_indices = @transform_1, window_bounds = array<i64: 16, 128>}, {transform_indices = @transform_2, window_bounds = array<i64: 1, 8, 128>}]} {
    %c0_i32 = arith.constant 0 : i32
    %0 = arith.cmpi eq, %arg1, %c0_i32 : i32
    %1 = arith.extui %0 : i1 to i32
    %c0_i32_0 = arith.constant 0 : i32
    %2 = arith.cmpi ne, %1, %c0_i32_0 : i32
    scf.if %2 {
      %cst_10 = arith.constant 0.000000e+00 : f32
      %12 = vector.broadcast %cst_10 : f32 to vector<1x8x128xf32>
      %c0_11 = arith.constant 0 : index
      %c0_12 = arith.constant 0 : index
      %c0_13 = arith.constant 0 : index
      %13 = vector.load %arg4[%c0_11, %c0_12, %c0_13] : memref<1x8x128xf32, #tpu.memory_space<vmem>>, vector<1x8x128xf32>
      tpu.vector_store %arg4[%c0_11, %c0_12, %c0_13], %12 {strides = array<i32>} : memref<1x8x128xf32, #tpu.memory_space<vmem>>, vector<1x8x128xf32>,
    } else {
    }
    %c0 = arith.constant 0 : index
    %c0_1 = arith.constant 0 : index
    %3 = vector.load %arg2[%c0, %c0_1] : memref<16x128xf32, #tpu.memory_space<vmem>>, vector<16x128xf32>
    %c0_2 = arith.constant 0 : index
    %c0_3 = arith.constant 0 : index
    %4 = vector.load %arg3[%c0_2, %c0_3] : memref<16x128xf32, #tpu.memory_space<vmem>>, vector<16x128xf32>
    %5 = arith.subf %3, %4 : vector<16x128xf32>
    %6 = arith.mulf %5, %5 : vector<16x128xf32>
    %c0_4 = arith.constant 0 : index
    %c0_5 = arith.constant 0 : index
    %c0_6 = arith.constant 0 : index
    %7 = vector.load %arg4[%c0_4, %c0_5, %c0_6] : memref<1x8x128xf32, #tpu.memory_space<vmem>>, vector<1x8x128xf32>
    %8 = vector.shape_cast %6 : vector<16x128xf32> to vector<1x2x8x128xf32>
    %cst = arith.constant dense<0.000000e+00> : vector<1x8x128xf32>
    %9 = vector.multi_reduction <add>, %8, %cst [1] : vector<1x2x8x128xf32> to vector<1x8x128xf32>
    %10 = arith.addf %7, %9 : vector<1x8x128xf32>
    %c0_7 = arith.constant 0 : index
    %c0_8 = arith.constant 0 : index
    %c0_9 = arith.constant 0 : index
    %11 = vector.load %arg4[%c0_7, %c0_8, %c0_9] : memref<1x8x128xf32, #tpu.memory_space<vmem>>, vector<1x8x128xf32>
    tpu.vector_store %arg4[%c0_7, %c0_8, %c0_9], %10 {strides = array<i32>} : memref<1x8x128xf32, #tpu.memory_space<vmem>>, vector<1x8x128xf32>,
    return
  }
  func.func @transform_0(%arg0: i32, %arg1: i32) -> (i32, i32) {
    %c1_i32 = arith.constant 1 : i32
    %0 = arith.muli %arg0, %c1_i32 : i32
    %1 = arith.addi %0, %arg1 : i32
    %c0_i32 = arith.constant 0 : i32
    %2 = arith.minsi %1, %c0_i32 : i32
    %c0_i32_0 = arith.constant 0 : i32
    %c0_i32_1 = arith.constant 0 : i32
    return %2, %c0_i32_0 : i32, i32
  }
  func.func @transform_1(%arg0: i32, %arg1: i32) -> (i32, i32) {
    %c1_i32 = arith.constant 1 : i32
    %0 = arith.muli %arg0, %c1_i32 : i32
    %1 = arith.addi %0, %arg1 : i32
    %c0_i32 = arith.constant 0 : i32
    %2 = arith.minsi %1, %c0_i32 : i32
    %c0_i32_0 = arith.constant 0 : i32
    %c0_i32_1 = arith.constant 0 : i32
    return %2, %c0_i32_0 : i32, i32
  }
  func.func @transform_2(%arg0: i32, %arg1: i32) -> (i32, i32, i32) {
    %c0_i32 = arith.constant 0 : i32
    %c0_i32_0 = arith.constant 0 : i32
    %c0_i32_1 = arith.constant 0 : i32
    return %arg0, %c0_i32, %c0_i32_0 : i32, i32, i32
  }
}

</mosaic_0001>

<llo_original>
// kernel: tpu_custom_call.1
$region0: #{tpu_custom_call.1}
  #allocation0 [shape = 'u32[]', space=smem, size = 0x4, offset = 0x4, fixed_abs, tag = 'smem constant byte address 0x4 - core index']
  #allocation1 [shape = 'u32[144,128]{1,0:T(1,128)}', space=vmem, size = 0x12000, scoped, tag = 'internal scratch']
  %s0 = inlined_call_operand.hbm [shape: f32[16,128], index: 0, kind: input, shape index: {}]
  %s1 = inlined_call_operand.hbm [shape: f32[16,128], index: 1, kind: input, shape index: {}]
  %s2 = inlined_call_operand.hbm [shape: f32[1,8,128], index: 2, kind: output, shape index: {}]
  %s3 = sld [smem:[#allocation0]]
  $region30: #{tpu_custom_call.1} parent=0
    _
  %s5 = ssub.s32 1, %s3
  %s6 = scalar_select 0, %s5, %s3
  $region1: #{tpu_custom_call.1} parent=0
    #allocation2 [shape = 'u8[8192]{0}', space=vmem, size = 0x2000, scoped, tag = 'input window, operand 0, single buffered']
    #allocation3 [shape = 's32[1]{0}', space=sflag, size = 0x4, scoped, tag = 'scoped memory for tpu_custom_call.1']
    #allocation4 [shape = 's32[1]{0}', space=sflag, size = 0x4, scoped, tag = 'scoped memory for tpu_custom_call.1']
    #allocation5 [shape = 'u8[8192]{0}', space=vmem, size = 0x2000, scoped, tag = 'input window, operand 1, single buffered']
    #allocation6 [shape = 's32[1]{0}', space=sflag, size = 0x4, scoped, tag = 'scoped memory for tpu_custom_call.1']
    #allocation7 [shape = 'u8[4096]{0}', space=vmem, size = 0x1000, scoped, tag = 'output window, operand 0, single buffered']
    %7 = vsyncpa [#allocation3], 0
    %8 = vsyncpa [#allocation6], 0
    %9 = vsyncpa [#allocation4], 0
    // Predicated region
    $region2: #{tpu_custom_call.1} parent=1 // pred_check
      _
    $region3: #{tpu_custom_call.1} parent=1 // pred_check_branch
      %11 = sbr.rel (0) target = $region5
    $region4: #{tpu_custom_call.1} parent=1 // pred_region
      %s12 = sadd.s32 0, 0
      %p13 = scmp.lt.s32.totalorder %s12, 0
      %s14 = scalar_select %p13, %s12, 0
      %s15 = smul.u32 2, %s14
      %s17 = ssub.s32 256, 256
      %18 = vsyncadd [#allocation3], %s17
      %s19 = smul.addr %s15, 128
      %s20 = scalar_lea.hbm %s0, %s19
      %s21 = sshll.u32 [#allocation2], 4
      %s22 = int_to_ptr.vmem [resolvable:$true] %s21
      %27 = dma.hbm_to_vmem [thread:$0]  %s20, 256, %s22, [#allocation3], 128, 128, 8
    $region5: #{tpu_custom_call.1} parent=1 // pred_fallthru
      _
    // Predicated region
    $region6: #{tpu_custom_call.1} parent=1 // pred_check
      _
    $region7: #{tpu_custom_call.1} parent=1 // pred_check_branch
      %29 = sbr.rel (0) target = $region9
    $region8: #{tpu_custom_call.1} parent=1 // pred_region
      %s30 = sadd.s32 0, 0
      %p31 = scmp.lt.s32.totalorder %s30, 0
      %s32 = scalar_select %p31, %s30, 0
      %s33 = smul.u32 2, %s32
      %s35 = ssub.s32 256, 256
      %36 = vsyncadd [#allocation6], %s35
      %s37 = smul.addr %s33, 128
      %s38 = scalar_lea.hbm %s1, %s37
      %s39 = sshll.u32 [#allocation5], 4
      %s40 = int_to_ptr.vmem [resolvable:$true] %s39
      %45 = dma.hbm_to_vmem [thread:$0]  %s38, 256, %s40, [#allocation6], 128, 128, 8
    $region9: #{tpu_custom_call.1} parent=1 // pred_fallthru
      _
    // Predicated region
    $region10: #{tpu_custom_call.1} parent=1 // pred_check
      _
    $region11: #{tpu_custom_call.1} parent=1 // pred_check_branch
      %47 = sbr.rel (0) target = $region13
    $region12: #{tpu_custom_call.1} parent=1 // pred_region
      %48 = dma.done [#allocation3], 256
    $region13: #{tpu_custom_call.1} parent=1 // pred_fallthru
      _
    // Predicated region
    $region14: #{tpu_custom_call.1} parent=1 // pred_check
      _
    $region15: #{tpu_custom_call.1} parent=1 // pred_check_branch
      %50 = sbr.rel (0) target = $region17
    $region16: #{tpu_custom_call.1} parent=1 // pred_region
      %51 = dma.done [#allocation6], 256
    $region17: #{tpu_custom_call.1} parent=1 // pred_fallthru
      _
    %s52 = sadd.s32 0, 0
    %p53 = scmp.lt.s32.totalorder %s52, 0
    %s54 = scalar_select %p53, %s52, 0
    %s55 = smul.u32 2, %s54
    %s56 = sadd.s32 0, 0
    %p57 = scmp.lt.s32.totalorder %s56, 0
    %s58 = scalar_select %p57, %s56, 0
    %s59 = smul.u32 2, %s58
    %p60 = scmp.eq.s32.totalorder 0, 0
    // Predicated region
    $region18: #{tpu_custom_call.1} parent=1 // pred_check
      %p61 = pneg %p60
    $region19: #{tpu_custom_call.1} parent=1 // pred_check_branch
      %63 = sbr.rel (%p61) target = $region21
    $region20: #{tpu_custom_call.1} parent=1 // pred_region
      %64 = vst [vmem:[#allocation7] sm:$0xff] 0.0
    $region21: #{tpu_custom_call.1} parent=1 // pred_fallthru
      _
    %v65 = vld [vmem:[#allocation2] sm:$0xff]
    %v66 = vld [vmem:[#allocation2 + $0x8] sm:$0xff]
    %v67 = vld [vmem:[#allocation5] sm:$0xff]
    %v68 = vld [vmem:[#allocation5 + $0x8] sm:$0xff]
    %v69 = vsub.f32 %v65, %v67
    %v70 = vsub.f32 %v66, %v68
    %v71 = vmul.f32 %v69, %v69
    %v72 = vmul.f32 %v70, %v70
    %v73 = vld [vmem:[#allocation7] sm:$0xff]
    %v74 = vadd.f32 %v71, %v72
    %v75 = vadd.f32 %v73, %v74
    %76 = vst [vmem:[#allocation7] sm:$0xff] %v75
    // Predicated region
    $region22: #{tpu_custom_call.1} parent=1 // pred_check
      _
    $region23: #{tpu_custom_call.1} parent=1 // pred_check_branch
      %78 = sbr.rel (0) target = $region25
    $region24: #{tpu_custom_call.1} parent=1 // pred_region
      %s80 = ssub.s32 128, 128
      %81 = vsyncadd [#allocation4], %s80
      %s83 = sshll.u32 [#allocation7], 4
      %s84 = int_to_ptr.vmem [resolvable:$true] %s83
      %86 = dma.vmem_to_hbm [thread:$0]  %s84, 128, %s2, [#allocation4]
    $region25: #{tpu_custom_call.1} parent=1 // pred_fallthru
      _
    // Predicated region
    $region26: #{tpu_custom_call.1} parent=1 // pred_check
      _
    $region27: #{tpu_custom_call.1} parent=1 // pred_check_branch
      %88 = sbr.rel (0) target = $region29
    $region28: #{tpu_custom_call.1} parent=1 // pred_region
      %89 = dma.done [#allocation4], 128
    $region29: #{tpu_custom_call.1} parent=1 // pred_fallthru
      _
    %90 = vsyncpa [#allocation3], 1
    %91 = vsyncpa [#allocation6], 1
    %92 = vsyncpa [#allocation4], 1

</llo_original>
